<compile_context>
chip_gen: v7x
topology: tpu7x:2x2x1
jax: 0.10.0
libtpu: 0.0.40
codegen_flags: <defaults>
</compile_context>

<pallas_src>
import jax
import jax.numpy as jnp
from jax.experimental import pallas as pl
from jax.experimental.pallas import tpu as pltpu

_LANES = 1024              # lane-dense width (multiple of 128)
_SUBLANE = 8               # sublane granularity for f32 tiles
_MIN_PALLAS_ELEMS = 1 << 16  # below ~256 KiB, fused XLA pow beats a kernel launch


def _round_up(x, m):
    return ((x + m - 1) // m) * m


# --------------------------------------------------------------------------
# Kernel: out = x ** n for integer n in [1, 8]
# --------------------------------------------------------------------------
def _pow_kernel(n_ref, x_ref, o_ref):
    # n_ref: SMEM scalar-prefetch ref (shape (1,)) holding the exponent.
    # n is kernel-invariant, so these are scalar-unit branches (scf.if),
    # not vector selects; each taken branch issues <= 3 vmuls per element.
    n = n_ref[0]
    x = x_ref[...]                      # single full-tile load, reused below

    @pl.when(n == 1)
    def _():
        o_ref[...] = x

    @pl.when(n == 2)
    def _():
        o_ref[...] = x * x

    @pl.when(n == 3)
    def _():
        o_ref[...] = x * x * x

    @pl.when(n == 4)
    def _():
        x2 = x * x
        o_ref[...] = x2 * x2

    @pl.when(n == 5)
    def _():
        x2 = x * x
        o_ref[...] = x2 * x2 * x

    @pl.when(n == 6)
    def _():
        x2 = x * x
        o_ref[...] = x2 * x2 * x2

    @pl.when(n == 7)
    def _():
        x2 = x * x
        x4 = x2 * x2
        o_ref[...] = x4 * x2 * x

    @pl.when(n == 8)
    def _():
        x2 = x * x
        x4 = x2 * x2
        o_ref[...] = x4 * x4
    # NOTE: exponents outside [1, 8] would leave o_ref unwritten; safe here
    # because torch.randint(1, 9, ...) is always in [1, 8].


# --------------------------------------------------------------------------
# Tiling / wrapper helpers
# --------------------------------------------------------------------------
def _tile_params():
    """Per-generation (max tile rows, vmem_limit_bytes)."""
    try:
        vmem_bytes = pltpu.get_tpu_info().vmem_capacity_bytes
    except Exception:
        vmem_bytes = None
    if vmem_bytes is not None and vmem_bytes >= (100 << 20):
        # v5e / v6e: 128 MiB physical VMEM -> 4 MiB streaming tiles, raise the
        # scoped limit so double-buffered in+out windows fit comfortably.
        return 1024, 64 << 20
    # v7x (64 MiB physical) or unknown: conservative 2 MiB tiles fit every
    # default scoped-VMEM limit without any override.
    return 512, None


def _pick_tm(rows, max_tm):
    """Choose tile rows: multiple of 8 (or the full axis), >=2 grid steps
    when the input is big enough (lets 'parallel' shard across v7x's 2 TCs)."""
    if rows % _SUBLANE != 0:
        if rows <= max_tm:
            return rows            # single block spanning the full axis
        return max_tm              # multiple of 8; Pallas pads the last block
    if rows <= _SUBLANE:
        return rows
    half = _round_up(pl.cdiv(rows, 2), _SUBLANE)
    return min(max_tm, half, rows)


def _pallas_pow(x2d, n, tm, vmem_limit):
    rows, lanes = x2d.shape
    total = rows * lanes
    cp_kwargs = dict(dimension_semantics=("parallel",))
    if vmem_limit is not None:
        cp_kwargs["vmem_limit_bytes"] = vmem_limit
    return pl.pallas_call(
        _pow_kernel,
        out_shape=jax.ShapeDtypeStruct((rows, lanes), x2d.dtype),
        grid_spec=pltpu.PrefetchScalarGridSpec(
            num_scalar_prefetch=1,
            grid=(pl.cdiv(rows, tm),),
            in_specs=[pl.BlockSpec((tm, lanes), lambda i, n_ref: (i, 0))],
            out_specs=pl.BlockSpec((tm, lanes), lambda i, n_ref: (i, 0)),
        ),
        compiler_params=pltpu.CompilerParams(**cp_kwargs),
        cost_estimate=pl.CostEstimate(
            flops=3 * total, transcendentals=0, bytes_accessed=8 * total),
    )(n, x2d)


def _xla_int_pow(x, n):
    """Plain-XLA branch-free square-and-multiply (n in [1, 15]); matches the
    repeated-multiply semantics of torch's integer pow (negative bases OK)."""
    one = jnp.ones_like(x)
    acc = jnp.where((n & 1) != 0, x, one)
    sq = x * x
    acc = acc * jnp.where((n & 2) != 0, sq, one)
    sq = sq * sq
    acc = acc * jnp.where((n & 4) != 0, sq, one)
    sq = sq * sq
    acc = acc * jnp.where((n & 8) != 0, sq, one)
    return acc


# --------------------------------------------------------------------------
# m2.forward
# --------------------------------------------------------------------------
def m2_forward(x, key, p1=1, *, min_pallas_elems=_MIN_PALLAS_ELEMS):
    """Reproduces m2.forward.  `p1` is unused (matches the PyTorch module).
    Returns (x ** n, n) where n ~ randint(1, 9)."""
    del p1
    # torch.randint(1, 9, (1,)) -> integer exponent in [1, 8]
    n = jax.random.randint(key, (1,), 1, 9, dtype=jnp.int32)

    total = x.size
    orig_shape = x.shape

    # small-input fast path: launch overhead would dominate, let XLA fuse it
    if total < min_pallas_elems:
        return _xla_int_pow(x, n[0]), n

    max_tm, vmem_limit = _tile_params()

    if total % _LANES == 0:
        # common path: free reshape to a lane-dense slab; no pad, no slice
        rows = total // _LANES
        x2d = x.reshape(rows, _LANES)
        tm = _pick_tm(rows, max_tm)
        out2d = _pallas_pow(x2d, n, tm, vmem_limit)
        return out2d.reshape(orig_shape), n

    # ragged-tail fallback: pad by at most _LANES - 1 elements (n >= 1, so the
    # zero padding stays zero and is sliced away afterwards)
    rows = pl.cdiv(total, _LANES)
    padded_total = rows * _LANES
    xf = jnp.pad(jnp.ravel(x), (0, padded_total - total))
    x2d = xf.reshape(rows, _LANES)
    tm = _pick_tm(rows, max_tm)
    out2d = _pallas_pow(x2d, n, tm, vmem_limit)
    out = out2d.reshape(-1)[:total].reshape(orig_shape)
    return out, n


# --------------------------------------------------------------------------
# Self-test
# --------------------------------------------------------------------------
if __name__ == "__main__":
    key = jax.random.PRNGKey(0)
    k0, k1, k2, k3, k4, k5 = jax.random.split(key, 6)

    # 1) module-sized input (1, 2, 2): small-input fast path (plain XLA)
    x_small = jax.random.normal(k0, (1, 2, 2), dtype=jnp.float32)
    y_small, n_small = m2_forward(x_small, k1)
    y_small = jax.block_until_ready(y_small)
    exp_small = x_small ** int(n_small[0])
    assert jnp.allclose(y_small, exp_small, rtol=1e-5, atol=1e-6), (
        f"mismatch (small path): exponent={int(n_small[0])}")

    # 2) lane-aligned input -> Pallas kernel, single (8, 1024) block
    x_a = jax.random.normal(k2, (4, 32, 64), dtype=jnp.float32)
    y_a, n_a = m2_forward(x_a, k3, min_pallas_elems=0)
    y_a = jax.block_until_ready(y_a)
    assert jnp.allclose(y_a, x_a ** int(n_a[0]), rtol=1e-5, atol=1e-5), (
        f"mismatch (aligned, 1 block): exponent={int(n_a[0])}")

    # 3) larger lane-aligned input -> multi-step grid (2 tiles of (32, 1024))
    x_b = jax.random.normal(k4, (32, 32, 64), dtype=jnp.float32)
    y_b, n_b = m2_forward(x_b, k3, min_pallas_elems=0)
    y_b = jax.block_until_ready(y_b)
    assert jnp.allclose(y_b, x_b ** int(n_b[0]), rtol=1e-5, atol=1e-4), (
        f"mismatch (aligned, tiled): exponent={int(n_b[0])}")

    # 4) ragged input -> pad/slice fallback path
    x_c = jax.random.normal(k5, (3, 5, 7), dtype=jnp.float32)
    y_c, n_c = m2_forward(x_c, k1, min_pallas_elems=0)
    y_c = jax.block_until_ready(y_c)
    assert jnp.allclose(y_c, x_c ** int(n_c[0]), rtol=1e-5, atol=1e-5), (
        f"mismatch (ragged): exponent={int(n_c[0])}")

    print("KERNEL_OK")
</pallas_src>

<mosaic_0001>
module attributes {stable_mosaic.version = 11 : i64} {
  func.func @_pow_kernel(%arg0: i32, %arg1: memref<1xi32, #tpu.memory_space<smem>>, %arg2: memref<8x1024xf32, #tpu.memory_space<vmem>>, %arg3: memref<8x1024xf32, #tpu.memory_space<vmem>>) attributes {dimension_semantics = [#tpu.dimension_semantics<parallel>], iteration_bounds = array<i64: 1>, scalar_prefetch = 1 : i64, scratch_operands = 0 : i64, tpu.core_type = #tpu.core_type<tc>, window_params = [{transform_indices = @transform_0, window_bounds = array<i64: 8, 1024>}, {transform_indices = @transform_1, window_bounds = array<i64: 8, 1024>}]} {
    %c0 = arith.constant 0 : index
    %0 = memref.load %arg1[%c0] : memref<1xi32, #tpu.memory_space<smem>>
    %c0_0 = arith.constant 0 : index
    %c0_1 = arith.constant 0 : index
    %1 = vector.load %arg2[%c0_0, %c0_1] : memref<8x1024xf32, #tpu.memory_space<vmem>>, vector<8x1024xf32>
    %c1_i32 = arith.constant 1 : i32
    %2 = arith.cmpi eq, %0, %c1_i32 : i32
    %3 = arith.extui %2 : i1 to i32
    %c0_i32 = arith.constant 0 : i32
    %4 = arith.cmpi ne, %3, %c0_i32 : i32
    scf.if %4 {
      %c0_9 = arith.constant 0 : index
      %c0_10 = arith.constant 0 : index
      %26 = vector.load %arg3[%c0_9, %c0_10] : memref<8x1024xf32, #tpu.memory_space<vmem>>, vector<8x1024xf32>
      tpu.vector_store %arg3[%c0_9, %c0_10], %1 {strides = array<i32>} : memref<8x1024xf32, #tpu.memory_space<vmem>>, vector<8x1024xf32>,
    } else {
    }
    %c2_i32 = arith.constant 2 : i32
    %5 = arith.cmpi eq, %0, %c2_i32 : i32
    %6 = arith.extui %5 : i1 to i32
    %c0_i32_2 = arith.constant 0 : i32
    %7 = arith.cmpi ne, %6, %c0_i32_2 : i32
    scf.if %7 {
      %26 = arith.mulf %1, %1 : vector<8x1024xf32>
      %c0_9 = arith.constant 0 : index
      %c0_10 = arith.constant 0 : index
      %27 = vector.load %arg3[%c0_9, %c0_10] : memref<8x1024xf32, #tpu.memory_space<vmem>>, vector<8x1024xf32>
      tpu.vector_store %arg3[%c0_9, %c0_10], %26 {strides = array<i32>} : memref<8x1024xf32, #tpu.memory_space<vmem>>, vector<8x1024xf32>,
    } else {
    }
    %c3_i32 = arith.constant 3 : i32
    %8 = arith.cmpi eq, %0, %c3_i32 : i32
    %9 = arith.extui %8 : i1 to i32
    %c0_i32_3 = arith.constant 0 : i32
    %10 = arith.cmpi ne, %9, %c0_i32_3 : i32
    scf.if %10 {
      %26 = arith.mulf %1, %1 : vector<8x1024xf32>
      %27 = arith.mulf %26, %1 : vector<8x1024xf32>
      %c0_9 = arith.constant 0 : index
      %c0_10 = arith.constant 0 : index
      %28 = vector.load %arg3[%c0_9, %c0_10] : memref<8x1024xf32, #tpu.memory_space<vmem>>, vector<8x1024xf32>
      tpu.vector_store %arg3[%c0_9, %c0_10], %27 {strides = array<i32>} : memref<8x1024xf32, #tpu.memory_space<vmem>>, vector<8x1024xf32>,
    } else {
    }
    %c4_i32 = arith.constant 4 : i32
    %11 = arith.cmpi eq, %0, %c4_i32 : i32
    %12 = arith.extui %11 : i1 to i32
    %c0_i32_4 = arith.constant 0 : i32
    %13 = arith.cmpi ne, %12, %c0_i32_4 : i32
    scf.if %13 {
      %26 = arith.mulf %1, %1 : vector<8x1024xf32>
      %27 = arith.mulf %26, %26 : vector<8x1024xf32>
      %c0_9 = arith.constant 0 : index
      %c0_10 = arith.constant 0 : index
      %28 = vector.load %arg3[%c0_9, %c0_10] : memref<8x1024xf32, #tpu.memory_space<vmem>>, vector<8x1024xf32>
      tpu.vector_store %arg3[%c0_9, %c0_10], %27 {strides = array<i32>} : memref<8x1024xf32, #tpu.memory_space<vmem>>, vector<8x1024xf32>,
    } else {
    }
    %c5_i32 = arith.constant 5 : i32
    %14 = arith.cmpi eq, %0, %c5_i32 : i32
    %15 = arith.extui %14 : i1 to i32
    %c0_i32_5 = arith.constant 0 : i32
    %16 = arith.cmpi ne, %15, %c0_i32_5 : i32
    scf.if %16 {
      %26 = arith.mulf %1, %1 : vector<8x1024xf32>
      %27 = arith.mulf %26, %26 : vector<8x1024xf32>
      %28 = arith.mulf %27, %1 : vector<8x1024xf32>
      %c0_9 = arith.constant 0 : index
      %c0_10 = arith.constant 0 : index
      %29 = vector.load %arg3[%c0_9, %c0_10] : memref<8x1024xf32, #tpu.memory_space<vmem>>, vector<8x1024xf32>
      tpu.vector_store %arg3[%c0_9, %c0_10], %28 {strides = array<i32>} : memref<8x1024xf32, #tpu.memory_space<vmem>>, vector<8x1024xf32>,
    } else {
    }
    %c6_i32 = arith.constant 6 : i32
    %17 = arith.cmpi eq, %0, %c6_i32 : i32
    %18 = arith.extui %17 : i1 to i32
    %c0_i32_6 = arith.constant 0 : i32
    %19 = arith.cmpi ne, %18, %c0_i32_6 : i32
    scf.if %19 {
      %26 = arith.mulf %1, %1 : vector<8x1024xf32>
      %27 = arith.mulf %26, %26 : vector<8x1024xf32>
      %28 = arith.mulf %27, %26 : vector<8x1024xf32>
      %c0_9 = arith.constant 0 : index
      %c0_10 = arith.constant 0 : index
      %29 = vector.load %arg3[%c0_9, %c0_10] : memref<8x1024xf32, #tpu.memory_space<vmem>>, vector<8x1024xf32>
      tpu.vector_store %arg3[%c0_9, %c0_10], %28 {strides = array<i32>} : memref<8x1024xf32, #tpu.memory_space<vmem>>, vector<8x1024xf32>,
    } else {
    }
    %c7_i32 = arith.constant 7 : i32
    %20 = arith.cmpi eq, %0, %c7_i32 : i32
    %21 = arith.extui %20 : i1 to i32
    %c0_i32_7 = arith.constant 0 : i32
    %22 = arith.cmpi ne, %21, %c0_i32_7 : i32
    scf.if %22 {
      %26 = arith.mulf %1, %1 : vector<8x1024xf32>
      %27 = arith.mulf %26, %26 : vector<8x1024xf32>
      %28 = arith.mulf %27, %26 : vector<8x1024xf32>
      %29 = arith.mulf %28, %1 : vector<8x1024xf32>
      %c0_9 = arith.constant 0 : index
      %c0_10 = arith.constant 0 : index
      %30 = vector.load %arg3[%c0_9, %c0_10] : memref<8x1024xf32, #tpu.memory_space<vmem>>, vector<8x1024xf32>
      tpu.vector_store %arg3[%c0_9, %c0_10], %29 {strides = array<i32>} : memref<8x1024xf32, #tpu.memory_space<vmem>>, vector<8x1024xf32>,
    } else {
    }
    %c8_i32 = arith.constant 8 : i32
    %23 = arith.cmpi eq, %0, %c8_i32 : i32
    %24 = arith.extui %23 : i1 to i32
    %c0_i32_8 = arith.constant 0 : i32
    %25 = arith.cmpi ne, %24, %c0_i32_8 : i32
    scf.if %25 {
      %26 = arith.mulf %1, %1 : vector<8x1024xf32>
      %27 = arith.mulf %26, %26 : vector<8x1024xf32>
      %28 = arith.mulf %27, %27 : vector<8x1024xf32>
      %c0_9 = arith.constant 0 : index
      %c0_10 = arith.constant 0 : index
      %29 = vector.load %arg3[%c0_9, %c0_10] : memref<8x1024xf32, #tpu.memory_space<vmem>>, vector<8x1024xf32>
      tpu.vector_store %arg3[%c0_9, %c0_10], %28 {strides = array<i32>} : memref<8x1024xf32, #tpu.memory_space<vmem>>, vector<8x1024xf32>,
    } else {
    }
    return
  }
  func.func @transform_0(%arg0: i32, %arg1: memref<1xi32, #tpu.memory_space<smem>>) -> (i32, i32) {
    %c0_i32 = arith.constant 0 : i32
    %c0_i32_0 = arith.constant 0 : i32
    return %arg0, %c0_i32 : i32, i32
  }
  func.func @transform_1(%arg0: i32, %arg1: memref<1xi32, #tpu.memory_space<smem>>) -> (i32, i32) {
    %c0_i32 = arith.constant 0 : i32
    %c0_i32_0 = arith.constant 0 : i32
    return %arg0, %c0_i32 : i32, i32
  }
}

</mosaic_0001>

<llo_original>
// kernel: tpu_custom_call.1
$region0: #{tpu_custom_call.1}
  #allocation0 [shape = 'u32[]', space=smem, size = 0x4, offset = 0x4, fixed_abs, tag = 'smem constant byte address 0x4 - core index']
  #allocation1 [shape = 'u32[144,128]{1,0:T(1,128)}', space=vmem, size = 0x12000, scoped, tag = 'internal scratch']
  #allocation2 [shape = 's32[1]{0}', space=sflag, size = 0x4, scoped, tag = 'scoped memory for tpu_custom_call.1']
  #allocation3 [shape = 's32[1]{0:T(128)S(6)}', space=smem, size = 0x200, scoped, tag = 'prefetched SMEM operand 0']
  %s0 = inlined_call_operand.<no memory space> [shape: s32[1], index: 0, kind: input, shape index: {}]
  %s1 = inlined_call_operand.hbm [shape: f32[8,1024], index: 1, kind: input, shape index: {}]
  %s2 = inlined_call_operand.hbm [shape: f32[8,1024], index: 2, kind: output, shape index: {}]
  %s3 = sld [smem:[#allocation0]]
  $region50: #{tpu_custom_call.1} parent=0
    _
  %s5 = ssub.s32 1, %s3
  %s6 = scalar_select 0, %s5, %s3
  %7 = sst [smem:[#allocation3]] %s0
  $region1: #{tpu_custom_call.1} parent=0
    #allocation4 [shape = 'u8[32768]{0}', space=vmem, size = 0x8000, scoped, tag = 'input window, operand 1, single buffered']
    #allocation5 [shape = 's32[1]{0}', space=sflag, size = 0x4, scoped, tag = 'scoped memory for tpu_custom_call.1']
    #allocation6 [shape = 's32[1]{0}', space=sflag, size = 0x4, scoped, tag = 'scoped memory for tpu_custom_call.1']
    #allocation7 [shape = 'u8[32768]{0}', space=vmem, size = 0x8000, scoped, tag = 'output window, operand 0, single buffered']
    %8 = vsyncpa [#allocation5], 0
    %9 = vsyncpa [#allocation6], 0
    // Predicated region
    $region2: #{tpu_custom_call.1} parent=1 // pred_check
      _
    $region3: #{tpu_custom_call.1} parent=1 // pred_check_branch
      %11 = sbr.rel (0) target = $region5
    $region4: #{tpu_custom_call.1} parent=1 // pred_region
      %s13 = ssub.s32 1024, 1024
      %14 = vsyncadd [#allocation5], %s13
      %s16 = sshll.u32 [#allocation4], 4
      %s17 = int_to_ptr.vmem [resolvable:$true] %s16
      %19 = dma.hbm_to_vmem [thread:$0]  %s1, 1024, %s17, [#allocation5]
    $region5: #{tpu_custom_call.1} parent=1 // pred_fallthru
      _
    // Predicated region
    $region6: #{tpu_custom_call.1} parent=1 // pred_check
      _
    $region7: #{tpu_custom_call.1} parent=1 // pred_check_branch
      %21 = sbr.rel (0) target = $region9
    $region8: #{tpu_custom_call.1} parent=1 // pred_region
      %22 = dma.done [#allocation5], 1024
    $region9: #{tpu_custom_call.1} parent=1 // pred_fallthru
      _
    %s23 = sld [smem:[#allocation3]]
    %v24 = vld [vmem:[#allocation4] sm:$0xff]
    %v25 = vld [vmem:[#allocation4 + $0x8] sm:$0xff]
    %v26 = vld [vmem:[#allocation4 + $0x10] sm:$0xff]
    %v27 = vld [vmem:[#allocation4 + $0x18] sm:$0xff]
    %v28 = vld [vmem:[#allocation4 + $0x20] sm:$0xff]
    %v29 = vld [vmem:[#allocation4 + $0x28] sm:$0xff]
    %v30 = vld [vmem:[#allocation4 + $0x30] sm:$0xff]
    %v31 = vld [vmem:[#allocation4 + $0x38] sm:$0xff]
    %p32 = scmp.eq.s32.totalorder %s23, 1
    // Predicated region
    $region10: #{tpu_custom_call.1} parent=1 // pred_check
      %p33 = pneg %p32
    $region11: #{tpu_custom_call.1} parent=1 // pred_check_branch
      %35 = sbr.rel (%p33) target = $region13
    $region12: #{tpu_custom_call.1} parent=1 // pred_region
      %36 = vst [vmem:[#allocation7] sm:$0xff] %v24
      %37 = vst [vmem:[#allocation7 + $0x8] sm:$0xff] %v25
      %38 = vst [vmem:[#allocation7 + $0x10] sm:$0xff] %v26
      %39 = vst [vmem:[#allocation7 + $0x18] sm:$0xff] %v27
      %40 = vst [vmem:[#allocation7 + $0x20] sm:$0xff] %v28
      %41 = vst [vmem:[#allocation7 + $0x28] sm:$0xff] %v29
      %42 = vst [vmem:[#allocation7 + $0x30] sm:$0xff] %v30
      %43 = vst [vmem:[#allocation7 + $0x38] sm:$0xff] %v31
    $region13: #{tpu_custom_call.1} parent=1 // pred_fallthru
      _
    %p44 = scmp.eq.s32.totalorder %s23, 2
    // Predicated region
    $region14: #{tpu_custom_call.1} parent=1 // pred_check
      %p45 = pneg %p44
    $region15: #{tpu_custom_call.1} parent=1 // pred_check_branch
      %47 = sbr.rel (%p45) target = $region17
    $region16: #{tpu_custom_call.1} parent=1 // pred_region
      %v48 = vmul.f32 %v24, %v24
      %v49 = vmul.f32 %v25, %v25
      %v50 = vmul.f32 %v26, %v26
      %v51 = vmul.f32 %v27, %v27
      %v52 = vmul.f32 %v28, %v28
      %v53 = vmul.f32 %v29, %v29
      %v54 = vmul.f32 %v30, %v30
      %v55 = vmul.f32 %v31, %v31
      %56 = vst [vmem:[#allocation7] sm:$0xff] %v48
      %57 = vst [vmem:[#allocation7 + $0x8] sm:$0xff] %v49
      %58 = vst [vmem:[#allocation7 + $0x10] sm:$0xff] %v50
      %59 = vst [vmem:[#allocation7 + $0x18] sm:$0xff] %v51
      %60 = vst [vmem:[#allocation7 + $0x20] sm:$0xff] %v52
      %61 = vst [vmem:[#allocation7 + $0x28] sm:$0xff] %v53
      %62 = vst [vmem:[#allocation7 + $0x30] sm:$0xff] %v54
      %63 = vst [vmem:[#allocation7 + $0x38] sm:$0xff] %v55
    $region17: #{tpu_custom_call.1} parent=1 // pred_fallthru
      _
    %p64 = scmp.eq.s32.totalorder %s23, 3
    // Predicated region
    $region18: #{tpu_custom_call.1} parent=1 // pred_check
      %p65 = pneg %p64
    $region19: #{tpu_custom_call.1} parent=1 // pred_check_branch
      %67 = sbr.rel (%p65) target = $region21
    $region20: #{tpu_custom_call.1} parent=1 // pred_region
      %v68 = vmul.f32 %v24, %v24
      %v69 = vmul.f32 %v25, %v25
      %v70 = vmul.f32 %v26, %v26
      %v71 = vmul.f32 %v27, %v27
      %v72 = vmul.f32 %v28, %v28
      %v73 = vmul.f32 %v29, %v29
      %v74 = vmul.f32 %v30, %v30
      %v75 = vmul.f32 %v31, %v31
      %v76 = vmul.f32 %v68, %v24
      %v77 = vmul.f32 %v69, %v25
      %v78 = vmul.f32 %v70, %v26
      %v79 = vmul.f32 %v71, %v27
      %v80 = vmul.f32 %v72, %v28
      %v81 = vmul.f32 %v73, %v29
      %v82 = vmul.f32 %v74, %v30
      %v83 = vmul.f32 %v75, %v31
      %84 = vst [vmem:[#allocation7] sm:$0xff] %v76
      %85 = vst [vmem:[#allocation7 + $0x8] sm:$0xff] %v77
      %86 = vst [vmem:[#allocation7 + $0x10] sm:$0xff] %v78
      %87 = vst [vmem:[#allocation7 + $0x18] sm:$0xff] %v79
      %88 = vst [vmem:[#allocation7 + $0x20] sm:$0xff] %v80
      %89 = vst [vmem:[#allocation7 + $0x28] sm:$0xff] %v81
      %90 = vst [vmem:[#allocation7 + $0x30] sm:$0xff] %v82
      %91 = vst [vmem:[#allocation7 + $0x38] sm:$0xff] %v83
    $region21: #{tpu_custom_call.1} parent=1 // pred_fallthru
      _
    %p92 = scmp.eq.s32.totalorder %s23, 4
    // Predicated region
    $region22: #{tpu_custom_call.1} parent=1 // pred_check
      %p93 = pneg %p92
    $region23: #{tpu_custom_call.1} parent=1 // pred_check_branch
      %95 = sbr.rel (%p93) target = $region25
    $region24: #{tpu_custom_call.1} parent=1 // pred_region
      %v96 = vmul.f32 %v24, %v24
      %v97 = vmul.f32 %v25, %v25
      %v98 = vmul.f32 %v26, %v26
      %v99 = vmul.f32 %v27, %v27
      %v100 = vmul.f32 %v28, %v28
      %v101 = vmul.f32 %v29, %v29
      %v102 = vmul.f32 %v30, %v30
      %v103 = vmul.f32 %v31, %v31
      %v104 = vmul.f32 %v96, %v96
      %v105 = vmul.f32 %v97, %v97
      %v106 = vmul.f32 %v98, %v98
      %v107 = vmul.f32 %v99, %v99
      %v108 = vmul.f32 %v100, %v100
      %v109 = vmul.f32 %v101, %v101
      %v110 = vmul.f32 %v102, %v102
      %v111 = vmul.f32 %v103, %v103
      %112 = vst [vmem:[#allocation7] sm:$0xff] %v104
      %113 = vst [vmem:[#allocation7 + $0x8] sm:$0xff] %v105
      %114 = vst [vmem:[#allocation7 + $0x10] sm:$0xff] %v106
      %115 = vst [vmem:[#allocation7 + $0x18] sm:$0xff] %v107
      %116 = vst [vmem:[#allocation7 + $0x20] sm:$0xff] %v108
      %117 = vst [vmem:[#allocation7 + $0x28] sm:$0xff] %v109
      %118 = vst [vmem:[#allocation7 + $0x30] sm:$0xff] %v110
      %119 = vst [vmem:[#allocation7 + $0x38] sm:$0xff] %v111
    $region25: #{tpu_custom_call.1} parent=1 // pred_fallthru
      _
    %p120 = scmp.eq.s32.totalorder %s23, 5
    // Predicated region
    $region26: #{tpu_custom_call.1} parent=1 // pred_check
      %p121 = pneg %p120
    $region27: #{tpu_custom_call.1} parent=1 // pred_check_branch
      %123 = sbr.rel (%p121) target = $region29
    $region28: #{tpu_custom_call.1} parent=1 // pred_region
      %v124 = vmul.f32 %v24, %v24
      %v125 = vmul.f32 %v25, %v25
      %v126 = vmul.f32 %v26, %v26
      %v127 = vmul.f32 %v27, %v27
      %v128 = vmul.f32 %v28, %v28
      %v129 = vmul.f32 %v29, %v29
      %v130 = vmul.f32 %v30, %v30
      %v131 = vmul.f32 %v31, %v31
      %v132 = vmul.f32 %v124, %v124
      %v133 = vmul.f32 %v125, %v125
      %v134 = vmul.f32 %v126, %v126
      %v135 = vmul.f32 %v127, %v127
      %v136 = vmul.f32 %v128, %v128
      %v137 = vmul.f32 %v129, %v129
      %v138 = vmul.f32 %v130, %v130
      %v139 = vmul.f32 %v131, %v131
      %v140 = vmul.f32 %v132, %v24
      %v141 = vmul.f32 %v133, %v25
      %v142 = vmul.f32 %v134, %v26
      %v143 = vmul.f32 %v135, %v27
      %v144 = vmul.f32 %v136, %v28
      %v145 = vmul.f32 %v137, %v29
      %v146 = vmul.f32 %v138, %v30
      %v147 = vmul.f32 %v139, %v31
      %148 = vst [vmem:[#allocation7] sm:$0xff] %v140
      %149 = vst [vmem:[#allocation7 + $0x8] sm:$0xff] %v141
      %150 = vst [vmem:[#allocation7 + $0x10] sm:$0xff] %v142
      %151 = vst [vmem:[#allocation7 + $0x18] sm:$0xff] %v143
      %152 = vst [vmem:[#allocation7 + $0x20] sm:$0xff] %v144
      %153 = vst [vmem:[#allocation7 + $0x28] sm:$0xff] %v145
      %154 = vst [vmem:[#allocation7 + $0x30] sm:$0xff] %v146
      %155 = vst [vmem:[#allocation7 + $0x38] sm:$0xff] %v147
    $region29: #{tpu_custom_call.1} parent=1 // pred_fallthru
      _
    %p156 = scmp.eq.s32.totalorder %s23, 6
    // Predicated region
    $region30: #{tpu_custom_call.1} parent=1 // pred_check
      %p157 = pneg %p156
    $region31: #{tpu_custom_call.1} parent=1 // pred_check_branch
      %159 = sbr.rel (%p157) target = $region33
    $region32: #{tpu_custom_call.1} parent=1 // pred_region
      %v160 = vmul.f32 %v24, %v24
      %v161 = vmul.f32 %v25, %v25
      %v162 = vmul.f32 %v26, %v26
      %v163 = vmul.f32 %v27, %v27
      %v164 = vmul.f32 %v28, %v28
      %v165 = vmul.f32 %v29, %v29
      %v166 = vmul.f32 %v30, %v30
      %v167 = vmul.f32 %v31, %v31
      %v168 = vmul.f32 %v160, %v160
      %v169 = vmul.f32 %v161, %v161
      %v170 = vmul.f32 %v162, %v162
      %v171 = vmul.f32 %v163, %v163
      %v172 = vmul.f32 %v164, %v164
      %v173 = vmul.f32 %v165, %v165
      %v174 = vmul.f32 %v166, %v166
      %v175 = vmul.f32 %v167, %v167
      %v176 = vmul.f32 %v168, %v160
      %v177 = vmul.f32 %v169, %v161
      %v178 = vmul.f32 %v170, %v162
      %v179 = vmul.f32 %v171, %v163
      %v180 = vmul.f32 %v172, %v164
      %v181 = vmul.f32 %v173, %v165
      %v182 = vmul.f32 %v174, %v166
      %v183 = vmul.f32 %v175, %v167
      %184 = vst [vmem:[#allocation7] sm:$0xff] %v176
      %185 = vst [vmem:[#allocation7 + $0x8] sm:$0xff] %v177
      %186 = vst [vmem:[#allocation7 + $0x10] sm:$0xff] %v178
      %187 = vst [vmem:[#allocation7 + $0x18] sm:$0xff] %v179
      %188 = vst [vmem:[#allocation7 + $0x20] sm:$0xff] %v180
      %189 = vst [vmem:[#allocation7 + $0x28] sm:$0xff] %v181
      %190 = vst [vmem:[#allocation7 + $0x30] sm:$0xff] %v182
      %191 = vst [vmem:[#allocation7 + $0x38] sm:$0xff] %v183
    $region33: #{tpu_custom_call.1} parent=1 // pred_fallthru
      _
    %p192 = scmp.eq.s32.totalorder %s23, 7
    // Predicated region
    $region34: #{tpu_custom_call.1} parent=1 // pred_check
      %p193 = pneg %p192
    $region35: #{tpu_custom_call.1} parent=1 // pred_check_branch
      %195 = sbr.rel (%p193) target = $region37
    $region36: #{tpu_custom_call.1} parent=1 // pred_region
      %v196 = vmul.f32 %v24, %v24
      %v197 = vmul.f32 %v25, %v25
      %v198 = vmul.f32 %v26, %v26
      %v199 = vmul.f32 %v27, %v27
      %v200 = vmul.f32 %v28, %v28
      %v201 = vmul.f32 %v29, %v29
      %v202 = vmul.f32 %v30, %v30
      %v203 = vmul.f32 %v31, %v31
      %v204 = vmul.f32 %v196, %v196
      %v205 = vmul.f32 %v197, %v197
      %v206 = vmul.f32 %v198, %v198
      %v207 = vmul.f32 %v199, %v199
      %v208 = vmul.f32 %v200, %v200
      %v209 = vmul.f32 %v201, %v201
      %v210 = vmul.f32 %v202, %v202
      %v211 = vmul.f32 %v203, %v203
      %v212 = vmul.f32 %v204, %v196
      %v213 = vmul.f32 %v205, %v197
      %v214 = vmul.f32 %v206, %v198
      %v215 = vmul.f32 %v207, %v199
      %v216 = vmul.f32 %v208, %v200
      %v217 = vmul.f32 %v209, %v201
      %v218 = vmul.f32 %v210, %v202
      %v219 = vmul.f32 %v211, %v203
      %v220 = vmul.f32 %v212, %v24
      %v221 = vmul.f32 %v213, %v25
      %v222 = vmul.f32 %v214, %v26
      %v223 = vmul.f32 %v215, %v27
      %v224 = vmul.f32 %v216, %v28
      %v225 = vmul.f32 %v217, %v29
      %v226 = vmul.f32 %v218, %v30
      %v227 = vmul.f32 %v219, %v31
      %228 = vst [vmem:[#allocation7] sm:$0xff] %v220
      %229 = vst [vmem:[#allocation7 + $0x8] sm:$0xff] %v221
      %230 = vst [vmem:[#allocation7 + $0x10] sm:$0xff] %v222
      %231 = vst [vmem:[#allocation7 + $0x18] sm:$0xff] %v223
      %232 = vst [vmem:[#allocation7 + $0x20] sm:$0xff] %v224
      %233 = vst [vmem:[#allocation7 + $0x28] sm:$0xff] %v225
      %234 = vst [vmem:[#allocation7 + $0x30] sm:$0xff] %v226
      %235 = vst [vmem:[#allocation7 + $0x38] sm:$0xff] %v227
    $region37: #{tpu_custom_call.1} parent=1 // pred_fallthru
      _
    %p236 = scmp.eq.s32.totalorder %s23, 8
    // Predicated region
    $region38: #{tpu_custom_call.1} parent=1 // pred_check
      %p237 = pneg %p236
    $region39: #{tpu_custom_call.1} parent=1 // pred_check_branch
      %239 = sbr.rel (%p237) target = $region41
    $region40: #{tpu_custom_call.1} parent=1 // pred_region
      %v240 = vmul.f32 %v24, %v24
      %v241 = vmul.f32 %v25, %v25
      %v242 = vmul.f32 %v26, %v26
      %v243 = vmul.f32 %v27, %v27
      %v244 = vmul.f32 %v28, %v28
      %v245 = vmul.f32 %v29, %v29
      %v246 = vmul.f32 %v30, %v30
      %v247 = vmul.f32 %v31, %v31
      %v248 = vmul.f32 %v240, %v240
      %v249 = vmul.f32 %v241, %v241
      %v250 = vmul.f32 %v242, %v242
      %v251 = vmul.f32 %v243, %v243
      %v252 = vmul.f32 %v244, %v244
      %v253 = vmul.f32 %v245, %v245
      %v254 = vmul.f32 %v246, %v246
      %v255 = vmul.f32 %v247, %v247
      %v256 = vmul.f32 %v248, %v248
      %v257 = vmul.f32 %v249, %v249
      %v258 = vmul.f32 %v250, %v250
      %v259 = vmul.f32 %v251, %v251
      %v260 = vmul.f32 %v252, %v252
      %v261 = vmul.f32 %v253, %v253
      %v262 = vmul.f32 %v254, %v254
      %v263 = vmul.f32 %v255, %v255
      %264 = vst [vmem:[#allocation7] sm:$0xff] %v256
      %265 = vst [vmem:[#allocation7 + $0x8] sm:$0xff] %v257
      %266 = vst [vmem:[#allocation7 + $0x10] sm:$0xff] %v258
      %267 = vst [vmem:[#allocation7 + $0x18] sm:$0xff] %v259
      %268 = vst [vmem:[#allocation7 + $0x20] sm:$0xff] %v260
      %269 = vst [vmem:[#allocation7 + $0x28] sm:$0xff] %v261
      %270 = vst [vmem:[#allocation7 + $0x30] sm:$0xff] %v262
      %271 = vst [vmem:[#allocation7 + $0x38] sm:$0xff] %v263
    $region41: #{tpu_custom_call.1} parent=1 // pred_fallthru
      _
    // Predicated region
    $region42: #{tpu_custom_call.1} parent=1 // pred_check
      _
    $region43: #{tpu_custom_call.1} parent=1 // pred_check_branch
      %273 = sbr.rel (0) target = $region45
    $region44: #{tpu_custom_call.1} parent=1 // pred_region
      %s275 = ssub.s32 1024, 1024
      %276 = vsyncadd [#allocation6], %s275
      %s278 = sshll.u32 [#allocation7], 4
      %s279 = int_to_ptr.vmem [resolvable:$true] %s278
      %281 = dma.vmem_to_hbm [thread:$0]  %s279, 1024, %s2, [#allocation6]
    $region45: #{tpu_custom_call.1} parent=1 // pred_fallthru
      _
    // Predicated region
    $region46: #{tpu_custom_call.1} parent=1 // pred_check
      _
    $region47: #{tpu_custom_call.1} parent=1 // pred_check_branch
      %283 = sbr.rel (0) target = $region49
    $region48: #{tpu_custom_call.1} parent=1 // pred_region
      %284 = dma.done [#allocation6], 1024
    $region49: #{tpu_custom_call.1} parent=1 // pred_fallthru
      _
    %285 = vsyncpa [#allocation5], 1
    %286 = vsyncpa [#allocation6], 1

</llo_original>
